<compile_context>
chip_gen: v7x
topology: tpu7x:2x2x1
jax: 0.10.0
libtpu: 0.0.40
codegen_flags: <defaults>
</compile_context>

<pallas_src>
import jax
import jax.numpy as jnp
from jax.experimental import pallas as pl
from jax.experimental.pallas import tpu as pltpu

NUM_GROUPS = 4
EPS = 1e-5


def _make_kernel(C, H, W):
    HW = H * W

    def kernel(x_ref, pv_ref, m_ref, g_ref, w1_ref, w2_ref, o_ref):
        x2 = x_ref[0]                                    # (C, HW) f32, channel-major slab

        def col(i):                                      # (C, 1) packed-parameter column
            return pv_ref[:, i:i + 1]

        def group_norm(h, gamma, beta):
            # One-pass stats: per-channel sum and sum-of-squares, then ONE tiny matmul
            # against the precomputed group-averaging matrix replaces the old serialized
            # per-group reduce/where chain (var = E[x^2] - E[x]^2, f32 accumulation).
            s = jnp.sum(h, axis=1, keepdims=True)                       # (C, 1)
            q = jnp.sum(h * h, axis=1, keepdims=True)                   # (C, 1)
            agg = jnp.dot(g_ref[...], jnp.concatenate([s, q], axis=1),
                          preferred_element_type=jnp.float32)           # (C, 2)
            mean = agg[:, 0:1]
            var = agg[:, 1:2] - mean * mean
            scale = gamma * jax.lax.rsqrt(var + EPS)
            shift = beta - mean * scale
            return h * scale + shift                                    # fused FMA apply

        def silu(h):
            return h * jax.nn.sigmoid(h)                 # f32 EUP sigmoid (free VLIW slot)

        def taps_bf16(h):
            # 9 shifted taps via XLU rolls; edge-validity masks precomputed host-side.
            # Each tap is masked in f32, then cast to bf16 individually so the concat
            # below only materializes a bf16 slab.
            out = []
            for k in range(9):
                ky, kx = divmod(k, 3)
                d = (ky - 1) * W + (kx - 1)              # flat source offset of this tap
                if d == 0:
                    out.append(h.astype(jnp.bfloat16))   # center tap: no roll, no mask
                else:
                    t = pltpu.roll(h, shift=(-d) % HW, axis=1)          # t[p] = h[p + d]
                    out.append((t * m_ref[k:k + 1, :]).astype(jnp.bfloat16))
            return out

        x_bf = x2.astype(jnp.bfloat16)                   # reused as conv2's 10th tap block

        # ---- main branch ----
        h = silu(group_norm(x2, col(0), col(1)))
        im1 = jnp.concatenate(taps_bf16(h), axis=0)                     # (9C, HW) bf16
        h = jnp.dot(w1_ref[...], im1, preferred_element_type=jnp.float32) + col(2)

        h = silu(group_norm(h, col(3), col(4)))
        # conv2 with the skip 1x1 conv fused in as a 10th tap block (K = 10C);
        # bias2 + bias_skip were pre-added host-side into col(5).
        im2 = jnp.concatenate(taps_bf16(h) + [x_bf], axis=0)            # (10C, HW) bf16
        h = jnp.dot(w2_ref[...], im2, preferred_element_type=jnp.float32) + col(5)

        o_ref[0] = h.astype(o_ref.dtype)                 # single lane-dense (C, HW) store

    return kernel


def resnet_block_pallas(x_nchw, params):
    """x_nchw: (N, C, H, W) float32. Returns (N, C, H, W) float32."""
    (g1, be1, w1, b1, g2, be2, w2, b2, ws, bs) = params
    N, C, H, W = x_nchw.shape
    assert C % NUM_GROUPS == 0
    HW = H * W
    cpg = C // NUM_GROUPS

    # channel-major per sample: (N, C, H*W) -- lane dim is H*W (multiple of 128)
    x2 = x_nchw.reshape(N, C, HW)

    # conv weights repacked for im2col matmul: (C_out, C_in, 3, 3) -> (C_out, 9*C_in)
    # (tap-major, channel-minor), bf16 MXU operands.
    w1k = jnp.transpose(w1, (0, 2, 3, 1)).reshape(C, 9 * C).astype(jnp.bfloat16)
    w2k = jnp.transpose(w2, (0, 2, 3, 1)).reshape(C, 9 * C).astype(jnp.bfloat16)
    wsk = ws[:, :, 0, 0].astype(jnp.bfloat16)            # (C_out, C_in) skip 1x1
    w2f = jnp.concatenate([w2k, wsk], axis=1)            # (C, 10C): conv2 + fused skip

    # packed per-channel params:
    # cols = [gamma1, beta1, bias1, gamma2, beta2, bias2 + bias_skip, pad, pad]
    z = jnp.zeros_like(bs)
    pvec = jnp.stack([g1, be1, b1, g2, be2, b2 + bs, z, z], axis=1).astype(jnp.float32)

    # 9 precomputed edge-validity masks, one per conv tap, in flattened-HW lane layout.
    pos = jnp.arange(HW)
    yp, xp = pos // W, pos % W
    rows = []
    for ky in range(3):
        for kx in range(3):
            dy, dx = ky - 1, kx - 1
            valid = (yp + dy >= 0) & (yp + dy < H) & (xp + dx >= 0) & (xp + dx < W)
            rows.append(valid)
    tap_masks = jnp.stack(rows, axis=0).astype(jnp.float32)             # (9, HW)

    # group-averaging matrix: (G @ per-channel sums) -> per-group mean replicated per channel
    cid = jnp.arange(C)
    gmat = ((cid[:, None] // cpg) == (cid[None, :] // cpg)).astype(jnp.float32)
    gmat = gmat / float(cpg * HW)                                       # (C, C)

    kernel = _make_kernel(C, H, W)

    out = pl.pallas_call(
        kernel,
        out_shape=jax.ShapeDtypeStruct((N, C, HW), jnp.float32),
        grid_spec=pltpu.PrefetchScalarGridSpec(
            num_scalar_prefetch=0,
            grid=(N,),
            in_specs=[
                pl.BlockSpec((1, C, HW), lambda n: (n, 0, 0)),   # x (channel-major slab)
                pl.BlockSpec((C, 8), lambda n: (0, 0)),          # packed param vectors
                pl.BlockSpec((9, HW), lambda n: (0, 0)),         # tap edge masks
                pl.BlockSpec((C, C), lambda n: (0, 0)),          # group-averaging matrix
                pl.BlockSpec((C, 9 * C), lambda n: (0, 0)),      # conv1 weight (bf16)
                pl.BlockSpec((C, 10 * C), lambda n: (0, 0)),     # conv2 + skip weight (bf16)
            ],
            out_specs=pl.BlockSpec((1, C, HW), lambda n: (n, 0, 0)),
        ),
        compiler_params=pltpu.CompilerParams(
            dimension_semantics=("parallel",),           # batch samples independent (megacore)
            vmem_limit_bytes=32 * 1024 * 1024,           # explicit budget (v7x: 64 MiB phys)
        ),
    )(x2, pvec, tap_masks, gmat, w1k, w2f)

    return out.reshape(N, C, H, W)


def resnet_block_reference(x, params):
    """Pure-JAX NCHW reference mirroring the PyTorch module (f32 throughout)."""
    (g1, be1, w1, b1, g2, be2, w2, b2, ws, bs) = params

    def gn(h, gamma, beta):
        N, C, H, W = h.shape
        hg = h.reshape(N, NUM_GROUPS, C // NUM_GROUPS, H, W)
        mean = hg.mean(axis=(2, 3, 4), keepdims=True)
        var = hg.var(axis=(2, 3, 4), keepdims=True)
        hn = ((hg - mean) / jnp.sqrt(var + EPS)).reshape(N, C, H, W)
        return hn * gamma.reshape(1, C, 1, 1) + beta.reshape(1, C, 1, 1)

    def conv(h, w, b, pad):
        y = jax.lax.conv_general_dilated(
            h, w, window_strides=(1, 1), padding=[(pad, pad), (pad, pad)],
            dimension_numbers=("NCHW", "OIHW", "NCHW"))
        return y + b.reshape(1, -1, 1, 1)

    h = gn(x, g1, be1)
    h = jax.nn.silu(h)
    h = conv(h, w1, b1, 1)
    h = gn(h, g2, be2)
    h = jax.nn.silu(h)
    h = conv(h, w2, b2, 1)
    return h + conv(x, ws, bs, 0)


def make_params(key, channels):
    ks = jax.random.split(key, 8)
    C = channels
    g1 = 1.0 + 0.1 * jax.random.normal(ks[0], (C,), jnp.float32)
    be1 = 0.1 * jax.random.normal(ks[1], (C,), jnp.float32)
    g2 = 1.0 + 0.1 * jax.random.normal(ks[2], (C,), jnp.float32)
    be2 = 0.1 * jax.random.normal(ks[3], (C,), jnp.float32)
    w1 = jax.random.normal(ks[4], (C, C, 3, 3), jnp.float32) * 0.1
    b1 = jax.random.normal(ks[5], (C,), jnp.float32) * 0.1
    w2 = jax.random.normal(ks[6], (C, C, 3, 3), jnp.float32) * 0.1
    b2 = jax.random.normal(ks[7], (C,), jnp.float32) * 0.1
    ws = jax.random.normal(ks[4], (C, C, 1, 1), jnp.float32) * 0.1
    bs = jax.random.normal(ks[5], (C,), jnp.float32) * 0.1
    return (g1, be1, w1, b1, g2, be2, w2, b2, ws, bs)


if __name__ == "__main__":
    key = jax.random.PRNGKey(0)
    k_x, k_p = jax.random.split(key)
    N, C, H, W = 2, 8, 16, 16          # channels divisible by num_groups=4; H*W multiple of 128
    x = jax.random.normal(k_x, (N, C, H, W), jnp.float32)
    params = make_params(k_p, C)

    out = jax.block_until_ready(resnet_block_pallas(x, params))
    ref = jax.block_until_ready(resnet_block_reference(x, params))

    assert out.shape == ref.shape == (N, C, H, W)
    # Tolerance sized for bf16 MXU operands (f32 accumulation) vs an f32 reference.
    assert jnp.allclose(out, ref, rtol=5e-2, atol=5e-2), \
        f"max abs err {jnp.max(jnp.abs(out - ref))}"
    print("KERNEL_OK")
</pallas_src>

<mosaic_0001>
module attributes {stable_mosaic.version = 11 : i64} {
  func.func @kernel(%arg0: i32, %arg1: memref<1x8x256xf32, #tpu.memory_space<vmem>>, %arg2: memref<8x8xf32, #tpu.memory_space<vmem>>, %arg3: memref<9x256xf32, #tpu.memory_space<vmem>>, %arg4: memref<8x8xf32, #tpu.memory_space<vmem>>, %arg5: memref<8x72xbf16, #tpu.memory_space<vmem>>, %arg6: memref<8x80xbf16, #tpu.memory_space<vmem>>, %arg7: memref<1x8x256xf32, #tpu.memory_space<vmem>>) attributes {dimension_semantics = [#tpu.dimension_semantics<parallel>], iteration_bounds = array<i64: 2>, scalar_prefetch = 0 : i64, scratch_operands = 0 : i64, tpu.core_type = #tpu.core_type<tc>, window_params = [{transform_indices = @transform_0, window_bounds = array<i64: 1, 8, 256>}, {pipeline_mode = #tpu.pipeline_mode<synchronous>, transform_indices = @transform_1, window_bounds = array<i64: 8, 8>}, {pipeline_mode = #tpu.pipeline_mode<synchronous>, transform_indices = @transform_2, window_bounds = array<i64: 9, 256>}, {pipeline_mode = #tpu.pipeline_mode<synchronous>, transform_indices = @transform_3, window_bounds = array<i64: 8, 8>}, {pipeline_mode = #tpu.pipeline_mode<synchronous>, transform_indices = @transform_4, window_bounds = array<i64: 8, 72>}, {pipeline_mode = #tpu.pipeline_mode<synchronous>, transform_indices = @transform_5, window_bounds = array<i64: 8, 80>}, {transform_indices = @transform_6, window_bounds = array<i64: 1, 8, 256>}]} {
    %c0 = arith.constant 0 : index
    %c0_0 = arith.constant 0 : index
    %c0_1 = arith.constant 0 : index
    %0 = vector.load %arg1[%c0, %c0_0, %c0_1] : memref<1x8x256xf32, #tpu.memory_space<vmem>>, vector<1x8x256xf32>
    %1 = vector.shape_cast %0 : vector<1x8x256xf32> to vector<8x256xf32>
    %2 = arith.truncf %1 : vector<8x256xf32> to vector<8x256xbf16>
    %c0_2 = arith.constant 0 : index
    %c0_3 = arith.constant 0 : index
    %3 = vector.load %arg2[%c0_2, %c0_3] : memref<8x8xf32, #tpu.memory_space<vmem>>, vector<8x1xf32>
    %c0_4 = arith.constant 0 : index
    %c1 = arith.constant 1 : index
    %4 = vector.load %arg2[%c0_4, %c1] : memref<8x8xf32, #tpu.memory_space<vmem>>, vector<8x1xf32>
    %cst = arith.constant dense<0.000000e+00> : vector<8xf32>
    %5 = vector.multi_reduction <add>, %1, %cst [1] : vector<8x256xf32> to vector<8xf32>
    %6 = vector.shape_cast %5 : vector<8xf32> to vector<8x1xf32>
    %7 = arith.mulf %1, %1 : vector<8x256xf32>
    %cst_5 = arith.constant dense<0.000000e+00> : vector<8xf32>
    %8 = vector.multi_reduction <add>, %7, %cst_5 [1] : vector<8x256xf32> to vector<8xf32>
    %9 = vector.shape_cast %8 : vector<8xf32> to vector<8x1xf32>
    %c0_6 = arith.constant 0 : index
    %c0_7 = arith.constant 0 : index
    %10 = vector.load %arg4[%c0_6, %c0_7] : memref<8x8xf32, #tpu.memory_space<vmem>>, vector<8x8xf32>
    %11 = tpu.concatenate %6, %9 in 1 : vector<8x1xf32>, vector<8x1xf32> -> vector<8x2xf32>
    %cst_8 = arith.constant dense<0.000000e+00> : vector<8x2xf32>
    %12 = tpu.matmul %10, %11, %cst_8 {dimension_numbers = #tpu.dot_dimension_numbers<[1], [0], [0], [1], [0, 0, 1, 1], [], []>} : vector<8x8xf32>, vector<8x2xf32>, vector<8x2xf32> -> vector<8x2xf32>
    %13 = vector.extract_strided_slice %12 {offsets = [0, 0], sizes = [8, 1], strides = [1, 1]} : vector<8x2xf32> to vector<8x1xf32>
    %14 = vector.extract_strided_slice %12 {offsets = [0, 1], sizes = [8, 1], strides = [1, 1]} : vector<8x2xf32> to vector<8x1xf32>
    %15 = arith.mulf %13, %13 : vector<8x1xf32>
    %16 = arith.subf %14, %15 : vector<8x1xf32>
    %cst_9 = arith.constant 9.99999974E-6 : f32
    %17 = vector.broadcast %cst_9 : f32 to vector<8x1xf32>
    %18 = arith.addf %16, %17 : vector<8x1xf32>
    %19 = math.rsqrt %18 : vector<8x1xf32>
    %20 = arith.mulf %3, %19 : vector<8x1xf32>
    %21 = arith.mulf %13, %20 : vector<8x1xf32>
    %22 = arith.subf %4, %21 : vector<8x1xf32>
    %23 = vector.broadcast %20 : vector<8x1xf32> to vector<8x256xf32>
    %24 = arith.mulf %1, %23 : vector<8x256xf32>
    %25 = vector.broadcast %22 : vector<8x1xf32> to vector<8x256xf32>
    %26 = arith.addf %24, %25 : vector<8x256xf32>
    %27 = arith.negf %26 : vector<8x256xf32>
    %28 = math.exp %27 : vector<8x256xf32>
    %cst_10 = arith.constant 1.000000e+00 : f32
    %29 = vector.broadcast %cst_10 : f32 to vector<8x256xf32>
    %30 = arith.addf %29, %28 : vector<8x256xf32>
    %31 = arith.divf %29, %30 : vector<8x256xf32>
    %32 = arith.mulf %26, %31 : vector<8x256xf32>
    %c17_i32 = arith.constant 17 : i32
    %33 = tpu.dynamic_rotate %32 by %c17_i32 dim 1 : vector<8x256xf32>, i32 -> vector<8x256xf32>
    %c0_11 = arith.constant 0 : index
    %c0_12 = arith.constant 0 : index
    %34 = vector.load %arg3[%c0_11, %c0_12] : memref<9x256xf32, #tpu.memory_space<vmem>>, vector<1x256xf32>
    %35 = vector.broadcast %34 : vector<1x256xf32> to vector<8x256xf32>
    %36 = arith.mulf %33, %35 : vector<8x256xf32>
    %37 = arith.truncf %36 : vector<8x256xf32> to vector<8x256xbf16>
    %c16_i32 = arith.constant 16 : i32
    %38 = tpu.dynamic_rotate %32 by %c16_i32 dim 1 : vector<8x256xf32>, i32 -> vector<8x256xf32>
    %c1_13 = arith.constant 1 : index
    %c0_14 = arith.constant 0 : index
    %39 = vector.load %arg3[%c1_13, %c0_14] : memref<9x256xf32, #tpu.memory_space<vmem>>, vector<1x256xf32>
    %40 = vector.broadcast %39 : vector<1x256xf32> to vector<8x256xf32>
    %41 = arith.mulf %38, %40 : vector<8x256xf32>
    %42 = arith.truncf %41 : vector<8x256xf32> to vector<8x256xbf16>
    %c15_i32 = arith.constant 15 : i32
    %43 = tpu.dynamic_rotate %32 by %c15_i32 dim 1 : vector<8x256xf32>, i32 -> vector<8x256xf32>
    %c2 = arith.constant 2 : index
    %c0_15 = arith.constant 0 : index
    %44 = vector.load %arg3[%c2, %c0_15] : memref<9x256xf32, #tpu.memory_space<vmem>>, vector<1x256xf32>
    %45 = vector.broadcast %44 : vector<1x256xf32> to vector<8x256xf32>
    %46 = arith.mulf %43, %45 : vector<8x256xf32>
    %47 = arith.truncf %46 : vector<8x256xf32> to vector<8x256xbf16>
    %c1_i32 = arith.constant 1 : i32
    %48 = tpu.dynamic_rotate %32 by %c1_i32 dim 1 : vector<8x256xf32>, i32 -> vector<8x256xf32>
    %c3 = arith.constant 3 : index
    %c0_16 = arith.constant 0 : index
    %49 = vector.load %arg3[%c3, %c0_16] : memref<9x256xf32, #tpu.memory_space<vmem>>, vector<1x256xf32>
    %50 = vector.broadcast %49 : vector<1x256xf32> to vector<8x256xf32>
    %51 = arith.mulf %48, %50 : vector<8x256xf32>
    %52 = arith.truncf %51 : vector<8x256xf32> to vector<8x256xbf16>
    %53 = arith.truncf %32 : vector<8x256xf32> to vector<8x256xbf16>
    %c255_i32 = arith.constant 255 : i32
    %54 = tpu.dynamic_rotate %32 by %c255_i32 dim 1 : vector<8x256xf32>, i32 -> vector<8x256xf32>
    %c5 = arith.constant 5 : index
    %c0_17 = arith.constant 0 : index
    %55 = vector.load %arg3[%c5, %c0_17] : memref<9x256xf32, #tpu.memory_space<vmem>>, vector<1x256xf32>
    %56 = vector.broadcast %55 : vector<1x256xf32> to vector<8x256xf32>
    %57 = arith.mulf %54, %56 : vector<8x256xf32>
    %58 = arith.truncf %57 : vector<8x256xf32> to vector<8x256xbf16>
    %c241_i32 = arith.constant 241 : i32
    %59 = tpu.dynamic_rotate %32 by %c241_i32 dim 1 : vector<8x256xf32>, i32 -> vector<8x256xf32>
    %c6 = arith.constant 6 : index
    %c0_18 = arith.constant 0 : index
    %60 = vector.load %arg3[%c6, %c0_18] : memref<9x256xf32, #tpu.memory_space<vmem>>, vector<1x256xf32>
    %61 = vector.broadcast %60 : vector<1x256xf32> to vector<8x256xf32>
    %62 = arith.mulf %59, %61 : vector<8x256xf32>
    %63 = arith.truncf %62 : vector<8x256xf32> to vector<8x256xbf16>
    %c240_i32 = arith.constant 240 : i32
    %64 = tpu.dynamic_rotate %32 by %c240_i32 dim 1 : vector<8x256xf32>, i32 -> vector<8x256xf32>
    %c7 = arith.constant 7 : index
    %c0_19 = arith.constant 0 : index
    %65 = vector.load %arg3[%c7, %c0_19] : memref<9x256xf32, #tpu.memory_space<vmem>>, vector<1x256xf32>
    %66 = vector.broadcast %65 : vector<1x256xf32> to vector<8x256xf32>
    %67 = arith.mulf %64, %66 : vector<8x256xf32>
    %68 = arith.truncf %67 : vector<8x256xf32> to vector<8x256xbf16>
    %c239_i32 = arith.constant 239 : i32
    %69 = tpu.dynamic_rotate %32 by %c239_i32 dim 1 : vector<8x256xf32>, i32 -> vector<8x256xf32>
    %c8 = arith.constant 8 : index
    %c0_20 = arith.constant 0 : index
    %70 = vector.load %arg3[%c8, %c0_20] : memref<9x256xf32, #tpu.memory_space<vmem>>, vector<1x256xf32>
    %71 = vector.broadcast %70 : vector<1x256xf32> to vector<8x256xf32>
    %72 = arith.mulf %69, %71 : vector<8x256xf32>
    %73 = arith.truncf %72 : vector<8x256xf32> to vector<8x256xbf16>
    %74 = tpu.concatenate %37, %42, %47, %52, %53, %58, %63, %68, %73 in 0 : vector<8x256xbf16>, vector<8x256xbf16>, vector<8x256xbf16>, vector<8x256xbf16>, vector<8x256xbf16>, vector<8x256xbf16>, vector<8x256xbf16>, vector<8x256xbf16>, vector<8x256xbf16> -> vector<72x256xbf16>
    %c0_21 = arith.constant 0 : index
    %c0_22 = arith.constant 0 : index
    %75 = vector.load %arg5[%c0_21, %c0_22] : memref<8x72xbf16, #tpu.memory_space<vmem>>, vector<8x72xbf16>
    %cst_23 = arith.constant dense<0.000000e+00> : vector<8x256xf32>
    %76 = tpu.matmul %75, %74, %cst_23 {dimension_numbers = #tpu.dot_dimension_numbers<[1], [0], [0], [1], [0, 0, 1, 1], [], []>} : vector<8x72xbf16>, vector<72x256xbf16>, vector<8x256xf32> -> vector<8x256xf32>
    %c0_24 = arith.constant 0 : index
    %c2_25 = arith.constant 2 : index
    %77 = vector.load %arg2[%c0_24, %c2_25] : memref<8x8xf32, #tpu.memory_space<vmem>>, vector<8x1xf32>
    %78 = vector.broadcast %77 : vector<8x1xf32> to vector<8x256xf32>
    %79 = arith.addf %76, %78 : vector<8x256xf32>
    %c0_26 = arith.constant 0 : index
    %c3_27 = arith.constant 3 : index
    %80 = vector.load %arg2[%c0_26, %c3_27] : memref<8x8xf32, #tpu.memory_space<vmem>>, vector<8x1xf32>
    %c0_28 = arith.constant 0 : index
    %c4 = arith.constant 4 : index
    %81 = vector.load %arg2[%c0_28, %c4] : memref<8x8xf32, #tpu.memory_space<vmem>>, vector<8x1xf32>
    %cst_29 = arith.constant dense<0.000000e+00> : vector<8xf32>
    %82 = vector.multi_reduction <add>, %79, %cst_29 [1] : vector<8x256xf32> to vector<8xf32>
    %83 = vector.shape_cast %82 : vector<8xf32> to vector<8x1xf32>
    %84 = arith.mulf %79, %79 : vector<8x256xf32>
    %cst_30 = arith.constant dense<0.000000e+00> : vector<8xf32>
    %85 = vector.multi_reduction <add>, %84, %cst_30 [1] : vector<8x256xf32> to vector<8xf32>
    %86 = vector.shape_cast %85 : vector<8xf32> to vector<8x1xf32>
    %c0_31 = arith.constant 0 : index
    %c0_32 = arith.constant 0 : index
    %87 = vector.load %arg4[%c0_31, %c0_32] : memref<8x8xf32, #tpu.memory_space<vmem>>, vector<8x8xf32>
    %88 = tpu.concatenate %83, %86 in 1 : vector<8x1xf32>, vector<8x1xf32> -> vector<8x2xf32>
    %cst_33 = arith.constant dense<0.000000e+00> : vector<8x2xf32>
    %89 = tpu.matmul %87, %88, %cst_33 {dimension_numbers = #tpu.dot_dimension_numbers<[1], [0], [0], [1], [0, 0, 1, 1], [], []>} : vector<8x8xf32>, vector<8x2xf32>, vector<8x2xf32> -> vector<8x2xf32>
    %90 = vector.extract_strided_slice %89 {offsets = [0, 0], sizes = [8, 1], strides = [1, 1]} : vector<8x2xf32> to vector<8x1xf32>
    %91 = vector.extract_strided_slice %89 {offsets = [0, 1], sizes = [8, 1], strides = [1, 1]} : vector<8x2xf32> to vector<8x1xf32>
    %92 = arith.mulf %90, %90 : vector<8x1xf32>
    %93 = arith.subf %91, %92 : vector<8x1xf32>
    %cst_34 = arith.constant 9.99999974E-6 : f32
    %94 = vector.broadcast %cst_34 : f32 to vector<8x1xf32>
    %95 = arith.addf %93, %94 : vector<8x1xf32>
    %96 = math.rsqrt %95 : vector<8x1xf32>
    %97 = arith.mulf %80, %96 : vector<8x1xf32>
    %98 = arith.mulf %90, %97 : vector<8x1xf32>
    %99 = arith.subf %81, %98 : vector<8x1xf32>
    %100 = vector.broadcast %97 : vector<8x1xf32> to vector<8x256xf32>
    %101 = arith.mulf %79, %100 : vector<8x256xf32>
    %102 = vector.broadcast %99 : vector<8x1xf32> to vector<8x256xf32>
    %103 = arith.addf %101, %102 : vector<8x256xf32>
    %104 = arith.negf %103 : vector<8x256xf32>
    %105 = math.exp %104 : vector<8x256xf32>
    %cst_35 = arith.constant 1.000000e+00 : f32
    %106 = vector.broadcast %cst_35 : f32 to vector<8x256xf32>
    %107 = arith.addf %106, %105 : vector<8x256xf32>
    %108 = arith.divf %106, %107 : vector<8x256xf32>
    %109 = arith.mulf %103, %108 : vector<8x256xf32>
    %c17_i32_36 = arith.constant 17 : i32
    %110 = tpu.dynamic_rotate %109 by %c17_i32_36 dim 1 : vector<8x256xf32>, i32 -> vector<8x256xf32>
    %c0_37 = arith.constant 0 : index
    %c0_38 = arith.constant 0 : index
    %111 = vector.load %arg3[%c0_37, %c0_38] : memref<9x256xf32, #tpu.memory_space<vmem>>, vector<1x256xf32>
    %112 = vector.broadcast %111 : vector<1x256xf32> to vector<8x256xf32>
    %113 = arith.mulf %110, %112 : vector<8x256xf32>
    %114 = arith.truncf %113 : vector<8x256xf32> to vector<8x256xbf16>
    %c16_i32_39 = arith.constant 16 : i32
    %115 = tpu.dynamic_rotate %109 by %c16_i32_39 dim 1 : vector<8x256xf32>, i32 -> vector<8x256xf32>
    %c1_40 = arith.constant 1 : index
    %c0_41 = arith.constant 0 : index
    %116 = vector.load %arg3[%c1_40, %c0_41] : memref<9x256xf32, #tpu.memory_space<vmem>>, vector<1x256xf32>
    %117 = vector.broadcast %116 : vector<1x256xf32> to vector<8x256xf32>
    %118 = arith.mulf %115, %117 : vector<8x256xf32>
    %119 = arith.truncf %118 : vector<8x256xf32> to vector<8x256xbf16>
    %c15_i32_42 = arith.constant 15 : i32
    %120 = tpu.dynamic_rotate %109 by %c15_i32_42 dim 1 : vector<8x256xf32>, i32 -> vector<8x256xf32>
    %c2_43 = arith.constant 2 : index
    %c0_44 = arith.constant 0 : index
    %121 = vector.load %arg3[%c2_43, %c0_44] : memref<9x256xf32, #tpu.memory_space<vmem>>, vector<1x256xf32>
    %122 = vector.broadcast %121 : vector<1x256xf32> to vector<8x256xf32>
    %123 = arith.mulf %120, %122 : vector<8x256xf32>
    %124 = arith.truncf %123 : vector<8x256xf32> to vector<8x256xbf16>
    %c1_i32_45 = arith.constant 1 : i32
    %125 = tpu.dynamic_rotate %109 by %c1_i32_45 dim 1 : vector<8x256xf32>, i32 -> vector<8x256xf32>
    %c3_46 = arith.constant 3 : index
    %c0_47 = arith.constant 0 : index
    %126 = vector.load %arg3[%c3_46, %c0_47] : memref<9x256xf32, #tpu.memory_space<vmem>>, vector<1x256xf32>
    %127 = vector.broadcast %126 : vector<1x256xf32> to vector<8x256xf32>
    %128 = arith.mulf %125, %127 : vector<8x256xf32>
    %129 = arith.truncf %128 : vector<8x256xf32> to vector<8x256xbf16>
    %130 = arith.truncf %109 : vector<8x256xf32> to vector<8x256xbf16>
    %c255_i32_48 = arith.constant 255 : i32
    %131 = tpu.dynamic_rotate %109 by %c255_i32_48 dim 1 : vector<8x256xf32>, i32 -> vector<8x256xf32>
    %c5_49 = arith.constant 5 : index
    %c0_50 = arith.constant 0 : index
    %132 = vector.load %arg3[%c5_49, %c0_50] : memref<9x256xf32, #tpu.memory_space<vmem>>, vector<1x256xf32>
    %133 = vector.broadcast %132 : vector<1x256xf32> to vector<8x256xf32>
    %134 = arith.mulf %131, %133 : vector<8x256xf32>
    %135 = arith.truncf %134 : vector<8x256xf32> to vector<8x256xbf16>
    %c241_i32_51 = arith.constant 241 : i32
    %136 = tpu.dynamic_rotate %109 by %c241_i32_51 dim 1 : vector<8x256xf32>, i32 -> vector<8x256xf32>
    %c6_52 = arith.constant 6 : index
    %c0_53 = arith.constant 0 : index
    %137 = vector.load %arg3[%c6_52, %c0_53] : memref<9x256xf32, #tpu.memory_space<vmem>>, vector<1x256xf32>
    %138 = vector.broadcast %137 : vector<1x256xf32> to vector<8x256xf32>
    %139 = arith.mulf %136, %138 : vector<8x256xf32>
    %140 = arith.truncf %139 : vector<8x256xf32> to vector<8x256xbf16>
    %c240_i32_54 = arith.constant 240 : i32
    %141 = tpu.dynamic_rotate %109 by %c240_i32_54 dim 1 : vector<8x256xf32>, i32 -> vector<8x256xf32>
    %c7_55 = arith.constant 7 : index
    %c0_56 = arith.constant 0 : index
    %142 = vector.load %arg3[%c7_55, %c0_56] : memref<9x256xf32, #tpu.memory_space<vmem>>, vector<1x256xf32>
    %143 = vector.broadcast %142 : vector<1x256xf32> to vector<8x256xf32>
    %144 = arith.mulf %141, %143 : vector<8x256xf32>
    %145 = arith.truncf %144 : vector<8x256xf32> to vector<8x256xbf16>
    %c239_i32_57 = arith.constant 239 : i32
    %146 = tpu.dynamic_rotate %109 by %c239_i32_57 dim 1 : vector<8x256xf32>, i32 -> vector<8x256xf32>
    %c8_58 = arith.constant 8 : index
    %c0_59 = arith.constant 0 : index
    %147 = vector.load %arg3[%c8_58, %c0_59] : memref<9x256xf32, #tpu.memory_space<vmem>>, vector<1x256xf32>
    %148 = vector.broadcast %147 : vector<1x256xf32> to vector<8x256xf32>
    %149 = arith.mulf %146, %148 : vector<8x256xf32>
    %150 = arith.truncf %149 : vector<8x256xf32> to vector<8x256xbf16>
    %151 = tpu.concatenate %114, %119, %124, %129, %130, %135, %140, %145, %150, %2 in 0 : vector<8x256xbf16>, vector<8x256xbf16>, vector<8x256xbf16>, vector<8x256xbf16>, vector<8x256xbf16>, vector<8x256xbf16>, vector<8x256xbf16>, vector<8x256xbf16>, vector<8x256xbf16>, vector<8x256xbf16> -> vector<80x256xbf16>
    %c0_60 = arith.constant 0 : index
    %c0_61 = arith.constant 0 : index
    %152 = vector.load %arg6[%c0_60, %c0_61] : memref<8x80xbf16, #tpu.memory_space<vmem>>, vector<8x80xbf16>
    %cst_62 = arith.constant dense<0.000000e+00> : vector<8x256xf32>
    %153 = tpu.matmul %152, %151, %cst_62 {dimension_numbers = #tpu.dot_dimension_numbers<[1], [0], [0], [1], [0, 0, 1, 1], [], []>} : vector<8x80xbf16>, vector<80x256xbf16>, vector<8x256xf32> -> vector<8x256xf32>
    %c0_63 = arith.constant 0 : index
    %c5_64 = arith.constant 5 : index
    %154 = vector.load %arg2[%c0_63, %c5_64] : memref<8x8xf32, #tpu.memory_space<vmem>>, vector<8x1xf32>
    %155 = vector.broadcast %154 : vector<8x1xf32> to vector<8x256xf32>
    %156 = arith.addf %153, %155 : vector<8x256xf32>
    %c0_65 = arith.constant 0 : index
    %c0_66 = arith.constant 0 : index
    %c0_67 = arith.constant 0 : index
    %157 = vector.load %arg7[%c0_65, %c0_66, %c0_67] : memref<1x8x256xf32, #tpu.memory_space<vmem>>, vector<1x8x256xf32>
    %158 = vector.shape_cast %157 : vector<1x8x256xf32> to vector<8x256xf32>
    %159 = vector.shape_cast %156 : vector<8x256xf32> to vector<1x8x256xf32>
    tpu.vector_store %arg7[%c0_65, %c0_66, %c0_67], %159 {strides = array<i32>} : memref<1x8x256xf32, #tpu.memory_space<vmem>>, vector<1x8x256xf32>,
    return
  }
  func.func @transform_0(%arg0: i32) -> (i32, i32, i32) {
    %c0_i32 = arith.constant 0 : i32
    %c0_i32_0 = arith.constant 0 : i32
    %c0_i32_1 = arith.constant 0 : i32
    return %arg0, %c0_i32, %c0_i32_0 : i32, i32, i32
  }
  func.func @transform_1(%arg0: i32) -> (i32, i32) {
    %c0_i32 = arith.constant 0 : i32
    %c0_i32_0 = arith.constant 0 : i32
    %c0_i32_1 = arith.constant 0 : i32
    return %c0_i32, %c0_i32_0 : i32, i32
  }
  func.func @transform_2(%arg0: i32) -> (i32, i32) {
    %c0_i32 = arith.constant 0 : i32
    %c0_i32_0 = arith.constant 0 : i32
    %c0_i32_1 = arith.constant 0 : i32
    return %c0_i32, %c0_i32_0 : i32, i32
  }
  func.func @transform_3(%arg0: i32) -> (i32, i32) {
    %c0_i32 = arith.constant 0 : i32
    %c0_i32_0 = arith.constant 0 : i32
    %c0_i32_1 = arith.constant 0 : i32
    return %c0_i32, %c0_i32_0 : i32, i32
  }
  func.func @transform_4(%arg0: i32) -> (i32, i32) {
    %c0_i32 = arith.constant 0 : i32
    %c0_i32_0 = arith.constant 0 : i32
    %c0_i32_1 = arith.constant 0 : i32
    return %c0_i32, %c0_i32_0 : i32, i32
  }
  func.func @transform_5(%arg0: i32) -> (i32, i32) {
    %c0_i32 = arith.constant 0 : i32
    %c0_i32_0 = arith.constant 0 : i32
    %c0_i32_1 = arith.constant 0 : i32
    return %c0_i32, %c0_i32_0 : i32, i32
  }
  func.func @transform_6(%arg0: i32) -> (i32, i32, i32) {
    %c0_i32 = arith.constant 0 : i32
    %c0_i32_0 = arith.constant 0 : i32
    %c0_i32_1 = arith.constant 0 : i32
    return %arg0, %c0_i32, %c0_i32_0 : i32, i32, i32
  }
}

</mosaic_0001>

<llo_original>
// kernel: tpu_custom_call.1
$region0: #{tpu_custom_call.1}
  #allocation0 [shape = 'u32[]', space=smem, size = 0x4, offset = 0x4, fixed_abs, tag = 'smem constant byte address 0x4 - core index']
  #allocation1 [shape = 'u32[144,128]{1,0:T(1,128)}', space=vmem, size = 0x12000, scoped, tag = 'internal scratch']
  %s0 = inlined_call_operand.hbm [shape: f32[2,8,256], index: 0, kind: input, shape index: {}]
  %s1 = inlined_call_operand.hbm [shape: f32[8,8], index: 1, kind: input, shape index: {}]
  %s2 = inlined_call_operand.hbm [shape: f32[9,256], index: 2, kind: input, shape index: {}]
  %s3 = inlined_call_operand.vmem [shape: f32[8,8], index: 3, kind: input, shape index: {}]
  %s4 = inlined_call_operand.vmem [shape: bf16[8,72], index: 4, kind: input, shape index: {}]
  %s5 = inlined_call_operand.vmem [shape: bf16[8,80], index: 5, kind: input, shape index: {}]
  %s6 = inlined_call_operand.hbm [shape: f32[2,8,256], index: 6, kind: output, shape index: {}]
  %s7 = sld [smem:[#allocation0]]
  $region69: #{tpu_custom_call.1} parent=0
    _
  %s9 = ssub.s32 1, %s7
  %s10 = scalar_select 0, %s9, %s7
  $region1: #{tpu_custom_call.1} parent=0
    #allocation2 [shape = 'u8[16384]{0}', space=vmem, size = 0x4000, scoped, tag = 'input window, operand 0']
    #allocation3 [shape = 's32[2]{0}', space=sflag, size = 0x8, scoped, tag = 'scoped memory for tpu_custom_call.1']
    #allocation4 [shape = 's32[2]{0}', space=sflag, size = 0x8, scoped, tag = 'scoped memory for tpu_custom_call.1']
    #allocation5 [shape = 'u8[4096]{0}', space=vmem, size = 0x1000, scoped, tag = 'input window, operand 1, single buffered']
    #allocation6 [shape = 's32[1]{0}', space=sflag, size = 0x4, scoped, tag = 'scoped memory for tpu_custom_call.1']
    #allocation7 [shape = 'u8[16384]{0}', space=vmem, size = 0x4000, scoped, tag = 'input window, operand 2, single buffered']
    #allocation8 [shape = 'u8[16384]{0}', space=vmem, size = 0x4000, scoped, tag = 'output window, operand 0']
    %11 = vsyncpa [#allocation3], 0
    %s12 = scalar_lea.sflag [#allocation3], 1
    %13 = vsyncpa %s12, 0
    %14 = vsyncpa [#allocation6], 0
    %15 = vsyncpa [#allocation4], 0
    %s16 = scalar_lea.sflag [#allocation4], 1
    %17 = vsyncpa %s16, 0
    loop: start=0, step=1, limit=4
    $region2: #{tpu_custom_call.1} parent=1 // loop_pre_header
      _
    $region3: #{tpu_custom_call.1} parent=1 // loop_header
      %s19 = sphi 0, %s23
      %p20 = scmp.ge.s32.totalorder %s19, 4
      %s29 = sphi 0, %s31
      %s32 = sphi 0, %s29
      %s33 = sphi 0, %s32
      %s49 = sphi 0, %s33
      %s53 = sphi 0, %s53
      %s55 = sphi 0, %s53
      %s56 = sphi 0, %s55
      %s70 = sphi 0, %s56
      %s74 = sphi 0, %s74
      %s76 = sphi 0, %s74
      %s77 = sphi 0, %s76
      %s91 = sphi 0, %s77
      %s95 = sphi 0, %s95
      %s97 = sphi 0, %s95
      %s98 = sphi 0, %s97
      %s112 = sphi 0, %s98
      %s116 = sphi 0, %s116
      %s118 = sphi 0, %s116
      %s119 = sphi 0, %s118
      %s133 = sphi 0, %s119
      %s137 = sphi 0, %s137
      %s139 = sphi 0, %s137
      %s140 = sphi 0, %s139
      %s154 = sphi 0, %s140
      %s160 = sphi 0, %s162
      %s163 = sphi 0, %s160
      %s164 = sphi 0, %s163
      %s180 = sphi 0, %s164
    $region4: #{tpu_custom_call.1} parent=1 // loop_header_branch
      %22 = sbr.rel (%p20) target = $region8
    $region5: #{tpu_custom_call.1} parent=1 // loop_body
      %s24 = ssub.s32 %s19, 1
      %s25 = ssub.s32 %s19, 2
      %s26 = sadd.s32 %s19, 1
      %s27 = ssub.s32 %s19, %s26
      %p28 = scmp.eq.s32.totalorder %s27, 0
      %s30 = sadd.s32 %s29, 1
      %s31 = scalar_select %p28, %s29, %s30
      %p34 = pneg %p28
      %p35 = scmp.eq.s32.totalorder %s19, 1
      %p36 = por %p34, %p35
      %p37 = scmp.ne.s32.totalorder %s29, %s32
      %p38 = scmp.eq.s32.totalorder %s19, 0
      %p39 = por %p37, %p38
      %p40 = scmp.ne.s32.totalorder %s29, %s32
      %p41 = scmp.eq.s32.totalorder %s24, 1
      %p42 = por %p40, %p41
      %p43 = scmp.ne.s32.totalorder %s32, %s33
      %p44 = scmp.eq.s32.totalorder %s24, 0
      %p45 = por %p43, %p44
      %p46 = scmp.ne.s32.totalorder %s32, %s33
      %p47 = scmp.eq.s32.totalorder %s25, 1
      %p48 = por %p46, %p47
      %p50 = scmp.ne.s32.totalorder %s33, %s49
      %p51 = scmp.eq.s32.totalorder %s25, 0
      %p52 = por %p50, %p51
      %s54 = sadd.s32 %s53, 1
      %p57 = scmp.eq.s32.totalorder %s19, 1
      %p58 = scmp.ne.s32.totalorder %s53, %s55
      %p59 = scmp.eq.s32.totalorder %s19, 0
      %p60 = por %p58, %p59
      %p61 = scmp.ne.s32.totalorder %s53, %s55
      %p62 = scmp.eq.s32.totalorder %s24, 1
      %p63 = por %p61, %p62
      %p64 = scmp.ne.s32.totalorder %s55, %s56
      %p65 = scmp.eq.s32.totalorder %s24, 0
      %p66 = por %p64, %p65
      %p67 = scmp.ne.s32.totalorder %s55, %s56
      %p68 = scmp.eq.s32.totalorder %s25, 1
      %p69 = por %p67, %p68
      %p71 = scmp.ne.s32.totalorder %s56, %s70
      %p72 = scmp.eq.s32.totalorder %s25, 0
      %p73 = por %p71, %p72
      %s75 = sadd.s32 %s74, 1
      %p78 = scmp.eq.s32.totalorder %s19, 1
      %p79 = scmp.ne.s32.totalorder %s74, %s76
      %p80 = scmp.eq.s32.totalorder %s19, 0
      %p81 = por %p79, %p80
      %p82 = scmp.ne.s32.totalorder %s74, %s76
      %p83 = scmp.eq.s32.totalorder %s24, 1
      %p84 = por %p82, %p83
      %p85 = scmp.ne.s32.totalorder %s76, %s77
      %p86 = scmp.eq.s32.totalorder %s24, 0
      %p87 = por %p85, %p86
      %p88 = scmp.ne.s32.totalorder %s76, %s77
      %p89 = scmp.eq.s32.totalorder %s25, 1
      %p90 = por %p88, %p89
      %p92 = scmp.ne.s32.totalorder %s77, %s91
      %p93 = scmp.eq.s32.totalorder %s25, 0
      %p94 = por %p92, %p93
      %s96 = sadd.s32 %s95, 1
      %p99 = scmp.eq.s32.totalorder %s19, 1
      %p100 = scmp.ne.s32.totalorder %s95, %s97
      %p101 = scmp.eq.s32.totalorder %s19, 0
      %p102 = por %p100, %p101
      %p103 = scmp.ne.s32.totalorder %s95, %s97
      %p104 = scmp.eq.s32.totalorder %s24, 1
      %p105 = por %p103, %p104
      %p106 = scmp.ne.s32.totalorder %s97, %s98
      %p107 = scmp.eq.s32.totalorder %s24, 0
      %p108 = por %p106, %p107
      %p109 = scmp.ne.s32.totalorder %s97, %s98
      %p110 = scmp.eq.s32.totalorder %s25, 1
      %p111 = por %p109, %p110
      %p113 = scmp.ne.s32.totalorder %s98, %s112
      %p114 = scmp.eq.s32.totalorder %s25, 0
      %p115 = por %p113, %p114
      %s117 = sadd.s32 %s116, 1
      %p120 = scmp.eq.s32.totalorder %s19, 1
      %p121 = scmp.ne.s32.totalorder %s116, %s118
      %p122 = scmp.eq.s32.totalorder %s19, 0
      %p123 = por %p121, %p122
      %p124 = scmp.ne.s32.totalorder %s116, %s118
      %p125 = scmp.eq.s32.totalorder %s24, 1
      %p126 = por %p124, %p125
      %p127 = scmp.ne.s32.totalorder %s118, %s119
      %p128 = scmp.eq.s32.totalorder %s24, 0
      %p129 = por %p127, %p128
      %p130 = scmp.ne.s32.totalorder %s118, %s119
      %p131 = scmp.eq.s32.totalorder %s25, 1
      %p132 = por %p130, %p131
      %p134 = scmp.ne.s32.totalorder %s119, %s133
      %p135 = scmp.eq.s32.totalorder %s25, 0
      %p136 = por %p134, %p135
      %s138 = sadd.s32 %s137, 1
      %p141 = scmp.eq.s32.totalorder %s19, 1
      %p142 = scmp.ne.s32.totalorder %s137, %s139
      %p143 = scmp.eq.s32.totalorder %s19, 0
      %p144 = por %p142, %p143
      %p145 = scmp.ne.s32.totalorder %s137, %s139
      %p146 = scmp.eq.s32.totalorder %s24, 1
      %p147 = por %p145, %p146
      %p148 = scmp.ne.s32.totalorder %s139, %s140
      %p149 = scmp.eq.s32.totalorder %s24, 0
      %p150 = por %p148, %p149
      %p151 = scmp.ne.s32.totalorder %s139, %s140
      %p152 = scmp.eq.s32.totalorder %s25, 1
      %p153 = por %p151, %p152
      %p155 = scmp.ne.s32.totalorder %s140, %s154
      %p156 = scmp.eq.s32.totalorder %s25, 0
      %p157 = por %p155, %p156
      %s158 = ssub.s32 %s19, %s26
      %p159 = scmp.eq.s32.totalorder %s158, 0
      %s161 = sadd.s32 %s160, 1
      %s162 = scalar_select %p159, %s160, %s161
      %p165 = pneg %p159
      %p166 = scmp.eq.s32.totalorder %s19, 1
      %p167 = por %p165, %p166
      %p168 = scmp.ne.s32.totalorder %s160, %s163
      %p169 = scmp.eq.s32.totalorder %s19, 0
      %p170 = por %p168, %p169
      %p171 = scmp.ne.s32.totalorder %s160, %s163
      %p172 = scmp.eq.s32.totalorder %s24, 1
      %p173 = por %p171, %p172
      %p174 = scmp.ne.s32.totalorder %s163, %s164
      %p175 = scmp.eq.s32.totalorder %s24, 0
      %p176 = por %p174, %p175
      %p177 = scmp.ne.s32.totalorder %s163, %s164
      %p178 = scmp.eq.s32.totalorder %s25, 1
      %p179 = por %p177, %p178
      %p181 = scmp.ne.s32.totalorder %s164, %s180
      %p182 = scmp.eq.s32.totalorder %s25, 0
      %p183 = por %p181, %p182
      %p184 = scmp.le.s32.totalorder 1, %s19
      %p185 = scmp.lt.s32.totalorder %s19, 3
      %p186 = pnand %p184, %p185
      %p187 = pneg %p186
      // Predicated region
      $region9: #{tpu_custom_call.1} parent=5 // pred_check
        _
      $region10: #{tpu_custom_call.1} parent=5 // pred_check_branch
        %189 = sbr.rel (%p186) target = $region12
      $region11: #{tpu_custom_call.1} parent=5 // pred_region
        %s190 = ssub.s32 %s19, 1
        // Predicated region
        $region13: #{tpu_custom_call.1} parent=11 // pred_check
          %p191 = pneg %p66
        $region14: #{tpu_custom_call.1} parent=11 // pred_check_branch
          %193 = sbr.rel (%p191) target = $region16
        $region15: #{tpu_custom_call.1} parent=11 // pred_region
          %s195 = ssub.s32 128, 128
          %196 = vsyncadd [#allocation6], %s195
          %s198 = sshll.u32 [#allocation5], 4
          %s199 = int_to_ptr.vmem [resolvable:$true] %s198
          %201 = dma.hbm_to_vmem [thread:$0]  %s1, 128, %s199, [#allocation6]
        $region16: #{tpu_custom_call.1} parent=11 // pred_fallthru
          _
        // Predicated region
        $region17: #{tpu_custom_call.1} parent=11 // pred_check
          %p202 = pneg %p87
        $region18: #{tpu_custom_call.1} parent=11 // pred_check_branch
          %204 = sbr.rel (%p202) target = $region20
        $region19: #{tpu_custom_call.1} parent=11 // pred_region
          %s206 = ssub.s32 512, 512
          %207 = vsyncadd [#allocation6], %s206
          %s208 = sshll.u32 [#allocation7], 4
          %s209 = int_to_ptr.vmem [resolvable:$true] %s208
          %214 = dma.hbm_to_vmem [thread:$0]  %s2, 512, %s209, [#allocation6], 256, 256, 16
        $region20: #{tpu_custom_call.1} parent=11 // pred_fallthru
          _
        // Predicated region
        $region21: #{tpu_custom_call.1} parent=11 // pred_check
          %p215 = pneg %p108
        $region22: #{tpu_custom_call.1} parent=11 // pred_check_branch
          %217 = sbr.rel (%p215) target = $region24
        $region23: #{tpu_custom_call.1} parent=11 // pred_region
          _
        $region24: #{tpu_custom_call.1} parent=11 // pred_fallthru
          _
        // Predicated region
        $region25: #{tpu_custom_call.1} parent=11 // pred_check
          %p218 = pneg %p129
        $region26: #{tpu_custom_call.1} parent=11 // pred_check_branch
          %220 = sbr.rel (%p218) target = $region28
        $region27: #{tpu_custom_call.1} parent=11 // pred_region
          _
        $region28: #{tpu_custom_call.1} parent=11 // pred_fallthru
          _
        // Predicated region
        $region29: #{tpu_custom_call.1} parent=11 // pred_check
          %p221 = pneg %p150
        $region30: #{tpu_custom_call.1} parent=11 // pred_check_branch
          %223 = sbr.rel (%p221) target = $region32
        $region31: #{tpu_custom_call.1} parent=11 // pred_region
          _
        $region32: #{tpu_custom_call.1} parent=11 // pred_fallthru
          _
      $region12: #{tpu_custom_call.1} parent=5 // pred_fallthru
        _
      %p224 = scmp.lt.s32.totalorder %s19, 2
      // Predicated region
      $region33: #{tpu_custom_call.1} parent=5 // pred_check
        %p225 = pneg %p224
      $region34: #{tpu_custom_call.1} parent=5 // pred_check_branch
        %227 = sbr.rel (%p225) target = $region36
      $region35: #{tpu_custom_call.1} parent=5 // pred_region
        // Predicated region
        $region37: #{tpu_custom_call.1} parent=35 // pred_check
          %p228 = pneg %p39
        $region38: #{tpu_custom_call.1} parent=35 // pred_check_branch
          %230 = sbr.rel (%p228) target = $region40
        $region39: #{tpu_custom_call.1} parent=35 // pred_region
          %s231 = sand.u32 %s29, 1
          %s232 = scalar_lea.sflag [#allocation3], %s231
          %s233 = sand.u32 %s29, 1
          %s234 = smul.addr %s233, 16
          %s235 = scalar_lea.vmem [#allocation2], %s234
          %s237 = ssub.s32 256, 256
          %238 = vsyncadd %s232, %s237
          %s239 = smul.addr %s19, 2
          %s240 = smul.addr %s239, 128
          %s241 = scalar_lea.hbm %s0, %s240
          %s243 = sshll.u32 %s235, 4
          %s244 = int_to_ptr.vmem [resolvable:$true] %s243
          %246 = dma.hbm_to_vmem [thread:$0]  %s241, 256, %s244, %s232
        $region40: #{tpu_custom_call.1} parent=35 // pred_fallthru
          _
      $region36: #{tpu_custom_call.1} parent=5 // pred_fallthru
        _
      %p247 = scmp.le.s32.totalorder 1, %s19
      %p248 = scmp.lt.s32.totalorder %s19, 3
      %p249 = pnand %p247, %p248
      %p250 = pneg %p249
      // Predicated region
      $region41: #{tpu_custom_call.1} parent=5 // pred_check
        _
      $region42: #{tpu_custom_call.1} parent=5 // pred_check_branch
        %252 = sbr.rel (%p249) target = $region44
      $region43: #{tpu_custom_call.1} parent=5 // pred_region
        %s253 = ssub.s32 %s19, 1
        %s254 = sand.u32 %s32, 1
        %s255 = scalar_lea.sflag [#allocation3], %s254
        %s256 = sand.u32 %s32, 1
        %s257 = smul.addr %s256, 16
        %s258 = scalar_lea.vmem [#allocation2], %s257
        // Predicated region
        $region45: #{tpu_custom_call.1} parent=43 // pred_check
          %p259 = pneg %p45
        $region46: #{tpu_custom_call.1} parent=43 // pred_check_branch
          %261 = sbr.rel (%p259) target = $region48
        $region47: #{tpu_custom_call.1} parent=43 // pred_region
          %262 = dma.done %s255, 256
        $region48: #{tpu_custom_call.1} parent=43 // pred_fallthru
          _
        // Predicated region
        $region49: #{tpu_custom_call.1} parent=43 // pred_check
          %p263 = pneg %p66
        $region50: #{tpu_custom_call.1} parent=43 // pred_check_branch
          %265 = sbr.rel (%p263) target = $region52
        $region51: #{tpu_custom_call.1} parent=43 // pred_region
          %266 = dma.done [#allocation6], 128
        $region52: #{tpu_custom_call.1} parent=43 // pred_fallthru
          _
        // Predicated region
        $region53: #{tpu_custom_call.1} parent=43 // pred_check
          %p267 = pneg %p87
        $region54: #{tpu_custom_call.1} parent=43 // pred_check_branch
          %269 = sbr.rel (%p267) target = $region56
        $region55: #{tpu_custom_call.1} parent=43 // pred_region
          %270 = dma.done [#allocation6], 512
        $region56: #{tpu_custom_call.1} parent=43 // pred_fallthru
          _
        %s271 = sand.u32 %s32, 1
        %s272 = scalar_lea.sflag [#allocation3], %s271
        %s273 = sand.u32 %s32, 1
        %s274 = smul.addr %s273, 16
        %s275 = scalar_lea.vmem [#allocation2], %s274
        %p276 = pneg %p45
        %p277 = pneg %p42
        %p278 = pneg %p66
        %p279 = pneg %p63
        %p280 = pneg %p87
        %p281 = pneg %p84
        %p282 = pneg %p108
        %p283 = pneg %p105
        %p284 = pneg %p129
        %p285 = pneg %p126
        %p286 = pneg %p150
        %p287 = pneg %p147
        %p288 = pneg %p176
        %p289 = pneg %p173
        %s290 = sand.u32 %s163, 1
        %s291 = scalar_lea.sflag [#allocation4], %s290
        %s292 = sand.u32 %s163, 1
        %s293 = smul.addr %s292, 16
        %s294 = scalar_lea.vmem [#allocation8], %s293
        %v296 = vld [vmem:[%s258] sm:$0xff]
        %v297 = vld [vmem:[%s258 + $0x8] sm:$0xff]
        %v298 = vpack.c.bf16 %v296, %v296
        %v299 = vpack.c.bf16 %v297, %v297
        %v300 = vld [vmem:[#allocation5] sm:$0xff]
        %v301 = vadd.f32 %v296, %v297
        %302 = vadd.xlane.f32.xlu0 %v301
        %v303 = vpop.xlane.xlu0 %302
        %v304 = vmul.f32 %v296, %v296
        %v305 = vmul.f32 %v297, %v297
        %v306 = vadd.f32 %v304, %v305
        %307 = vadd.xlane.f32.xlu0 %v306
        %v308 = vpop.xlane.xlu0 %307
        %v309 = vld [vmem:[%s3] sm:$0xff]
        %vm310 = vcmask 7168
        %v311 = vsel %vm310, %v303, %v308
        %vm312 = vcmask 64512
        %v314 = vsel %vm312, %v309, 0
        %316 = vmatprep.subr.mxu0 0.0
        %317 = vmatpush1.msra.mxu0 %v311
        %318 = vmatprep.subr.mxu0 0.0
        %319 = vmatpush1.msra.mxu0 0.0
        %320 = vmatprep.subr.mxu0 0.0
        %321 = vmatpush1.msra.mxu0 0.0
        %322 = vmatprep.subr.mxu0 0.0
        %323 = vmatpush1.msra.mxu0 0.0
        %324 = vmatprep.subr.mxu0 0.0
        %325 = vmatpush1.msra.mxu0 0.0
        %326 = vmatprep.subr.mxu0 0.0
        %327 = vmatpush1.msra.mxu0 0.0
        %328 = vmatprep.subr.mxu0 0.0
        %329 = vmatpush1.msra.mxu0 0.0
        %330 = vmatprep.subr.mxu0 0.0
        %331 = vmatpush1.msra.mxu0 0.0
        %332 = vmatprep.subr.mxu0 0.0
        %333 = vmatpush1.msra.mxu0 0.0
        %334 = vmatprep.subr.mxu0 0.0
        %335 = vmatpush1.msra.mxu0 0.0
        %336 = vmatprep.subr.mxu0 0.0
        %337 = vmatpush1.msra.mxu0 0.0
        %338 = vmatprep.subr.mxu0 0.0
        %339 = vmatpush1.msra.mxu0 0.0
        %340 = vmatprep.subr.mxu0 0.0
        %341 = vmatpush1.msra.mxu0 0.0
        %342 = vmatprep.subr.mxu0 0.0
        %343 = vmatpush1.msra.mxu0 0.0
        %344 = vmatprep.subr.mxu0 0.0
        %345 = vmatpush1.msra.mxu0 0.0
        %346 = vmatprep.subr.mxu0 0.0
        %347 = vmatpush1.msra.mxu0 0.0
        %348 = vmatprep.subr.mxu0 0.0
        %349 = vmatpush1.msra.mxu0 0.0
        %350 = vmatprep.subr.mxu0 0.0
        %351 = vmatpush1.msra.mxu0 0.0
        %352 = vmatprep.subr.mxu0 0.0
        %353 = vmatpush1.msra.mxu0 0.0
        %354 = vmatprep.subr.mxu0 0.0
        %355 = vmatpush1.msra.mxu0 0.0
        %356 = vmatprep.subr.mxu0 0.0
        %357 = vmatpush1.msra.mxu0 0.0
        %358 = vmatprep.subr.mxu0 0.0
        %359 = vmatpush1.msra.mxu0 0.0
        %360 = vmatprep.subr.mxu0 0.0
        %361 = vmatpush1.msra.mxu0 0.0
        %362 = vmatprep.subr.mxu0 0.0
        %363 = vmatpush1.msra.mxu0 0.0
        %364 = vmatprep.subr.mxu0 0.0
        %365 = vmatpush1.msra.mxu0 0.0
        %366 = vmatprep.subr.mxu0 0.0
        %367 = vmatpush1.msra.mxu0 0.0
        %368 = vmatprep.subr.mxu0 0.0
        %369 = vmatpush1.msra.mxu0 0.0
        %370 = vmatprep.subr.mxu0 0.0
        %371 = vmatpush1.msra.mxu0 0.0
        %372 = vmatprep.subr.mxu0 0.0
        %373 = vmatpush1.msra.mxu0 0.0
        %374 = vmatprep.subr.mxu0 0.0
        %375 = vmatpush1.msra.mxu0 0.0
        %376 = vmatprep.subr.mxu0 0.0
        %377 = vmatpush1.msra.mxu0 0.0
        %378 = vmatprep.subr.mxu0 0.0
        %379 = vmatpush1.msra.mxu0 0.0
        %380 = vmatprep.mubr.f32.mxu0 0.0
        %381 = vmatmul.mubr.f32.gmra.mrb[0].mxu0 %v314
        %v382 = vpop.f32.mrb[0].mxu0
        %v383 = vadd.f32 0.0, %v382
        %v384 = vpop.f32.mrb[0].mxu0
        %385 = vdwg.mxu0
        %v386 = vmul.f32 %v383, %v383
        %388 = vrot.lane.b32.xlu0 %v386, 1
        %v389 = vpop.permute.xlu0 %388
        %v391 = vsub.f32 %v383, %v389
        %v392 = vadd.f32 %v391, 1e-05
        %v393 = vrsqrt.pop %v392
        %395 = vrot.lane.b32.xlu0 %v393, 127
        %v396 = vpop.permute.xlu0 %395
        %v398 = vmul.f32 %v300, %v396
        %v399 = vmul.f32 %v383, %v398
        %401 = vrot.lane.b32.xlu0 %v399, 1
        %v402 = vpop.permute.xlu0 %401
        %v404 = vsub.f32 %v300, %v402
        %406 = vset.pattern.permute.xlu0 0
        %407 = vperm.xlu0 %406, %v398
        %v408 = vpop.permute.xlu0 %407
        %v410 = vmul.f32 %v296, %v408
        %v411 = vmul.f32 %v297, %v408
        %413 = vset.pattern.permute.xlu0 1
        %414 = vperm.xlu0 %413, %v404
        %v415 = vpop.permute.xlu0 %414
        %v417 = vadd.f32 %v410, %v415
        %v418 = vadd.f32 %v411, %v415
        %v419 = vxor.u32 %v417, 2147483648
        %v420 = vxor.u32 %v418, 2147483648
        %v421 = vmul.f32 %v419, 1.442695
        %v422 = vpow.pop %v421
        %v423 = vmul.f32 %v420, 1.442695
        %v424 = vpow.pop %v423
        %v425 = vadd.f32 %v422, 1.0
        %v426 = vadd.f32 %v424, 1.0
        %v427 = vrcp.pop %v425
        %v428 = vmul.f32 1.0, %v427
        %v429 = vrcp.pop %v426
        %v430 = vmul.f32 1.0, %v429
        %v431 = vmul.f32 %v417, %v428
        %v432 = vmul.f32 %v418, %v430
        %433 = vrot.lane.b32.xlu0 %v431, 17
        %v434 = vpop.permute.xlu0 %433
        %435 = vrot.lane.b32.xlu0 %v432, 17
        %v436 = vpop.permute.xlu0 %435
        %v437 = vlaneseq
        %v438 = vand.u32 %v437, 127
        %vm439 = vcmp.lt.s32.totalorder %v438, 17
        %v440 = vsel %vm439, %v434, %v436
        %v441 = vsel %vm439, %v436, %v434
        %v442 = vld [vmem:[#allocation7] ss:$8 sm:$0x3]
        %v444 = vlaneseq
        %v445 = vshrl.u32 %v444, 7
        %v446 = vsub.s32 0, %v445
        %v447 = vrot.slane %v442, %v446
        %v448 = vlaneseq
        %v449 = vshrl.u32 %v448, 7
        %v450 = vsub.s32 1, %v449
        %v451 = vrot.slane %v442, %v450
        %v454 = vmul.f32 %v441, %v447
        %v455 = vmul.f32 %v440, %v451
        %v456 = vpack.c.bf16 %v454, %v454
        %v457 = vpack.c.bf16 %v455, %v455
        %458 = vrot.lane.b32.xlu0 %v431, 16
        %v459 = vpop.permute.xlu0 %458
        %460 = vrot.lane.b32.xlu0 %v432, 16
        %v461 = vpop.permute.xlu0 %460
        %vm462 = vcmp.lt.s32.totalorder %v438, 16
        %v463 = vsel %vm462, %v459, %v461
        %v464 = vsel %vm462, %v461, %v459
        %s465 = scalar_lea.vmem [#allocation7], 1
        %v466 = vld [vmem:[%s465] ss:$8 sm:$0x3]
        %v468 = vlaneseq
        %v469 = vshrl.u32 %v468, 7
        %v470 = vsub.s32 0, %v469
        %v471 = vrot.slane %v466, %v470
        %v472 = vlaneseq
        %v473 = vshrl.u32 %v472, 7
        %v474 = vsub.s32 1, %v473
        %v475 = vrot.slane %v466, %v474
        %v478 = vmul.f32 %v464, %v471
        %v479 = vmul.f32 %v463, %v475
        %v480 = vpack.c.bf16 %v478, %v478
        %v481 = vpack.c.bf16 %v479, %v479
        %482 = vrot.lane.b32.xlu0 %v431, 15
        %v483 = vpop.permute.xlu0 %482
        %484 = vrot.lane.b32.xlu0 %v432, 15
        %v485 = vpop.permute.xlu0 %484
        %vm486 = vcmp.lt.s32.totalorder %v438, 15
        %v487 = vsel %vm486, %v483, %v485
        %v488 = vsel %vm486, %v485, %v483
        %s489 = scalar_lea.vmem [#allocation7], 2
        %v490 = vld [vmem:[%s489] ss:$8 sm:$0x3]
        %v492 = vlaneseq
        %v493 = vshrl.u32 %v492, 7
        %v494 = vsub.s32 0, %v493
        %v495 = vrot.slane %v490, %v494
        %v496 = vlaneseq
        %v497 = vshrl.u32 %v496, 7
        %v498 = vsub.s32 1, %v497
        %v499 = vrot.slane %v490, %v498
        %v502 = vmul.f32 %v488, %v495
        %v503 = vmul.f32 %v487, %v499
        %v504 = vpack.c.bf16 %v502, %v502
        %v505 = vpack.c.bf16 %v503, %v503
        %506 = vrot.lane.b32.xlu0 %v431, 1
        %v507 = vpop.permute.xlu0 %506
        %508 = vrot.lane.b32.xlu0 %v432, 1
        %v509 = vpop.permute.xlu0 %508
        %vm510 = vcmp.lt.s32.totalorder %v438, 1
        %v511 = vsel %vm510, %v507, %v509
        %v512 = vsel %vm510, %v509, %v507
        %s513 = scalar_lea.vmem [#allocation7], 3
        %v514 = vld [vmem:[%s513] ss:$8 sm:$0x3]
        %v516 = vlaneseq
        %v517 = vshrl.u32 %v516, 7
        %v518 = vsub.s32 0, %v517
        %v519 = vrot.slane %v514, %v518
        %v520 = vlaneseq
        %v521 = vshrl.u32 %v520, 7
        %v522 = vsub.s32 1, %v521
        %v523 = vrot.slane %v514, %v522
        %v526 = vmul.f32 %v512, %v519
        %v527 = vmul.f32 %v511, %v523
        %v528 = vpack.c.bf16 %v526, %v526
        %v529 = vpack.c.bf16 %v527, %v527
        %v530 = vpack.c.bf16 %v431, %v431
        %v531 = vpack.c.bf16 %v432, %v432
        %532 = vrot.lane.b32.xlu0 %v431, 127
        %v533 = vpop.permute.xlu0 %532
        %534 = vrot.lane.b32.xlu0 %v432, 127
        %v535 = vpop.permute.xlu0 %534
        %vm536 = vcmp.lt.s32.totalorder %v438, 127
        %v537 = vsel %vm536, %v533, %v535
        %v538 = vsel %vm536, %v535, %v533
        %s539 = scalar_lea.vmem [#allocation7], 5
        %v540 = vld [vmem:[%s539] ss:$8 sm:$0x3]
        %v542 = vlaneseq
        %v543 = vshrl.u32 %v542, 7
        %v544 = vsub.s32 0, %v543
        %v545 = vrot.slane %v540, %v544
        %v546 = vlaneseq
        %v547 = vshrl.u32 %v546, 7
        %v548 = vsub.s32 1, %v547
        %v549 = vrot.slane %v540, %v548
        %v552 = vmul.f32 %v537, %v545
        %v553 = vmul.f32 %v538, %v549
        %v554 = vpack.c.bf16 %v552, %v552
        %v555 = vpack.c.bf16 %v553, %v553
        %556 = vrot.lane.b32.xlu0 %v431, 113
        %v557 = vpop.permute.xlu0 %556
        %558 = vrot.lane.b32.xlu0 %v432, 113
        %v559 = vpop.permute.xlu0 %558
        %vm560 = vcmp.lt.s32.totalorder %v438, 113
        %v561 = vsel %vm560, %v557, %v559
        %v562 = vsel %vm560, %v559, %v557
        %s563 = scalar_lea.vmem [#allocation7], 6
        %v564 = vld [vmem:[%s563] ss:$8 sm:$0x3]
        %v566 = vlaneseq
        %v567 = vshrl.u32 %v566, 7
        %v568 = vsub.s32 0, %v567
        %v569 = vrot.slane %v564, %v568
        %v570 = vlaneseq
        %v571 = vshrl.u32 %v570, 7
        %v572 = vsub.s32 1, %v571
        %v573 = vrot.slane %v564, %v572
        %v576 = vmul.f32 %v561, %v569
        %v577 = vmul.f32 %v562, %v573
        %v578 = vpack.c.bf16 %v576, %v576
        %v579 = vpack.c.bf16 %v577, %v577
        %580 = vrot.lane.b32.xlu0 %v431, 112
        %v581 = vpop.permute.xlu0 %580
        %582 = vrot.lane.b32.xlu0 %v432, 112
        %v583 = vpop.permute.xlu0 %582
        %vm584 = vcmp.lt.s32.totalorder %v438, 112
        %v585 = vsel %vm584, %v581, %v583
        %v586 = vsel %vm584, %v583, %v581
        %s587 = scalar_lea.vmem [#allocation7], 7
        %v588 = vld [vmem:[%s587] ss:$8 sm:$0x3]
        %v590 = vlaneseq
        %v591 = vshrl.u32 %v590, 7
        %v592 = vsub.s32 0, %v591
        %v593 = vrot.slane %v588, %v592
        %v594 = vlaneseq
        %v595 = vshrl.u32 %v594, 7
        %v596 = vsub.s32 1, %v595
        %v597 = vrot.slane %v588, %v596
        %v600 = vmul.f32 %v585, %v593
        %v601 = vmul.f32 %v586, %v597
        %v602 = vpack.c.bf16 %v600, %v600
        %v603 = vpack.c.bf16 %v601, %v601
        %604 = vrot.lane.b32.xlu0 %v431, 111
        %v605 = vpop.permute.xlu0 %604
        %606 = vrot.lane.b32.xlu0 %v432, 111
        %v607 = vpop.permute.xlu0 %606
        %vm608 = vcmp.lt.s32.totalorder %v438, 111
        %v609 = vsel %vm608, %v605, %v607
        %v610 = vsel %vm608, %v607, %v605
        %s611 = scalar_lea.vmem [#allocation7], 16
        %v612 = vld [vmem:[%s611] ss:$8 sm:$0x3]
        %v614 = vlaneseq
        %v615 = vshrl.u32 %v614, 7
        %v616 = vsub.s32 0, %v615
        %v617 = vrot.slane %v612, %v616
        %v618 = vlaneseq
        %v619 = vshrl.u32 %v618, 7
        %v620 = vsub.s32 1, %v619
        %v621 = vrot.slane %v612, %v620
        %v624 = vmul.f32 %v609, %v617
        %v625 = vmul.f32 %v610, %v621
        %v626 = vpack.c.bf16 %v624, %v624
        %v627 = vpack.c.bf16 %v625, %v625
        %v630 = vrot.slane %v480, 4
        %v631 = vrot.slane %v481, 4
        %v634 = vrot.slane %v528, 4
        %v635 = vrot.slane %v529, 4
        %v638 = vrot.slane %v554, 4
        %v639 = vrot.slane %v555, 4
        %v642 = vrot.slane %v602, 4
        %v643 = vrot.slane %v603, 4
        %vm644 = vcmask 1043456
        %v647 = vsel %vm644, %v456, %v630
        %v651 = vsel %vm644, %v457, %v631
        %v655 = vsel %vm644, %v504, %v634
        %v659 = vsel %vm644, %v505, %v635
        %v663 = vsel %vm644, %v530, %v638
        %v667 = vsel %vm644, %v531, %v639
        %v671 = vsel %vm644, %v578, %v642
        %v675 = vsel %vm644, %v579, %v643
        %v677 = vld [vmem:[%s4] sm:$0xf]
        %679 = vset.pattern.permute.xlu0 2
        %680 = vperm.xlu0 %679, %v300
        %v681 = vpop.permute.xlu0 %680
        %vm683 = vcmask 588800
        %v685 = vsel %vm683, %v677, 0
        %v688 = vsel %vm644, %v626, 0
        %v691 = vsel %vm644, %v627, 0
        %693 = vmatprep.subr.bf16.mxu0 %v651
        %694 = vmatpush1.bf16.msra.mxu0 %v647
        %695 = vmatprep.subr.bf16.mxu0 %v659
        %696 = vmatpush1.bf16.msra.mxu0 %v655
        %697 = vmatprep.subr.bf16.mxu0 %v667
        %698 = vmatpush1.bf16.msra.mxu0 %v663
        %699 = vmatprep.subr.bf16.mxu0 %v675
        %700 = vmatpush1.bf16.msra.mxu0 %v671
        %701 = vmatprep.subr.bf16.mxu0 %v691
        %702 = vmatpush1.bf16.msra.mxu0 %v688
        %703 = vmatprep.subr.bf16.mxu0 0
        %704 = vmatpush1.bf16.msra.mxu0 0
        %705 = vmatprep.subr.bf16.mxu0 0
        %706 = vmatpush1.bf16.msra.mxu0 0
        %707 = vmatprep.subr.bf16.mxu0 0
        %708 = vmatpush1.bf16.msra.mxu0 0
        %709 = vmatprep.subr.bf16.mxu0 0
        %710 = vmatpush1.bf16.msra.mxu0 0
        %711 = vmatprep.subr.bf16.mxu0 0
        %712 = vmatpush1.bf16.msra.mxu0 0
        %713 = vmatprep.subr.bf16.mxu0 0
        %714 = vmatpush1.bf16.msra.mxu0 0
        %715 = vmatprep.subr.bf16.mxu0 0
        %716 = vmatpush1.bf16.msra.mxu0 0
        %717 = vmatprep.subr.bf16.mxu0 0
        %718 = vmatpush1.bf16.msra.mxu0 0
        %719 = vmatprep.subr.bf16.mxu0 0
        %720 = vmatpush1.bf16.msra.mxu0 0
        %721 = vmatprep.subr.bf16.mxu0 0
        %722 = vmatpush1.bf16.msra.mxu0 0
        %723 = vmatprep.subr.bf16.mxu0 0
        %724 = vmatpush1.bf16.msra.mxu0 0
        %725 = vmatprep.mubr.bf16.mxu0 0
        %726 = vmatmul.mubr.bf16.gmra.mrb[0].mxu0 %v685
        %v727 = vpop.f32.mrb[0].mxu0
        %v728 = vadd.f32 %v681, %v727
        %v729 = vpop.f32.mrb[0].mxu0
        %v730 = vadd.f32 %v681, %v729
        %v731 = vpop.f32.mrb[0].mxu0
        %v732 = vpop.f32.mrb[0].mxu0
        %733 = vdwg.mxu0
        %v734 = vadd.f32 %v728, %v730
        %735 = vadd.xlane.f32.xlu0 %v734
        %v736 = vpop.xlane.xlu0 %735
        %v737 = vmul.f32 %v728, %v728
        %v738 = vmul.f32 %v730, %v730
        %v739 = vadd.f32 %v737, %v738
        %740 = vadd.xlane.f32.xlu0 %v739
        %v741 = vpop.xlane.xlu0 %740
        %v742 = vsel %vm310, %v736, %v741
        %743 = vmatprep.subr.mxu0 0.0
        %744 = vmatpush1.msra.mxu0 %v742
        %745 = vmatprep.subr.mxu0 0.0
        %746 = vmatpush1.msra.mxu0 0.0
        %747 = vmatprep.subr.mxu0 0.0
        %748 = vmatpush1.msra.mxu0 0.0
        %749 = vmatprep.subr.mxu0 0.0
        %750 = vmatpush1.msra.mxu0 0.0
        %751 = vmatprep.subr.mxu0 0.0
        %752 = vmatpush1.msra.mxu0 0.0
        %753 = vmatprep.subr.mxu0 0.0
        %754 = vmatpush1.msra.mxu0 0.0
        %755 = vmatprep.subr.mxu0 0.0
        %756 = vmatpush1.msra.mxu0 0.0
        %757 = vmatprep.subr.mxu0 0.0
        %758 = vmatpush1.msra.mxu0 0.0
        %759 = vmatprep.subr.mxu0 0.0
        %760 = vmatpush1.msra.mxu0 0.0
        %761 = vmatprep.subr.mxu0 0.0
        %762 = vmatpush1.msra.mxu0 0.0
        %763 = vmatprep.subr.mxu0 0.0
        %764 = vmatpush1.msra.mxu0 0.0
        %765 = vmatprep.subr.mxu0 0.0
        %766 = vmatpush1.msra.mxu0 0.0
        %767 = vmatprep.subr.mxu0 0.0
        %768 = vmatpush1.msra.mxu0 0.0
        %769 = vmatprep.subr.mxu0 0.0
        %770 = vmatpush1.msra.mxu0 0.0
        %771 = vmatprep.subr.mxu0 0.0
        %772 = vmatpush1.msra.mxu0 0.0
        %773 = vmatprep.subr.mxu0 0.0
        %774 = vmatpush1.msra.mxu0 0.0
        %775 = vmatprep.subr.mxu0 0.0
        %776 = vmatpush1.msra.mxu0 0.0
        %777 = vmatprep.subr.mxu0 0.0
        %778 = vmatpush1.msra.mxu0 0.0
        %779 = vmatprep.subr.mxu0 0.0
        %780 = vmatpush1.msra.mxu0 0.0
        %781 = vmatprep.subr.mxu0 0.0
        %782 = vmatpush1.msra.mxu0 0.0
        %783 = vmatprep.subr.mxu0 0.0
        %784 = vmatpush1.msra.mxu0 0.0
        %785 = vmatprep.subr.mxu0 0.0
        %786 = vmatpush1.msra.mxu0 0.0
        %787 = vmatprep.subr.mxu0 0.0
        %788 = vmatpush1.msra.mxu0 0.0
        %789 = vmatprep.subr.mxu0 0.0
        %790 = vmatpush1.msra.mxu0 0.0
        %791 = vmatprep.subr.mxu0 0.0
        %792 = vmatpush1.msra.mxu0 0.0
        %793 = vmatprep.subr.mxu0 0.0
        %794 = vmatpush1.msra.mxu0 0.0
        %795 = vmatprep.subr.mxu0 0.0
        %796 = vmatpush1.msra.mxu0 0.0
        %797 = vmatprep.subr.mxu0 0.0
        %798 = vmatpush1.msra.mxu0 0.0
        %799 = vmatprep.subr.mxu0 0.0
        %800 = vmatpush1.msra.mxu0 0.0
        %801 = vmatprep.subr.mxu0 0.0
        %802 = vmatpush1.msra.mxu0 0.0
        %803 = vmatprep.subr.mxu0 0.0
        %804 = vmatpush1.msra.mxu0 0.0
        %805 = vmatprep.subr.mxu0 0.0
        %806 = vmatpush1.msra.mxu0 0.0
        %807 = vmatprep.mubr.f32.mxu0 0.0
        %808 = vmatmul.mubr.f32.gmra.mrb[0].mxu0 %v314
        %v809 = vpop.f32.mrb[0].mxu0
        %v810 = vadd.f32 0.0, %v809
        %v811 = vpop.f32.mrb[0].mxu0
        %812 = vdwg.mxu0
        %v813 = vmul.f32 %v810, %v810
        %815 = vrot.lane.b32.xlu0 %v813, 1
        %v816 = vpop.permute.xlu0 %815
        %v818 = vsub.f32 %v810, %v816
        %v819 = vadd.f32 %v818, 1e-05
        %v820 = vrsqrt.pop %v819
        %822 = vrot.lane.b32.xlu0 %v820, 2
        %v823 = vpop.permute.xlu0 %822
        %v825 = vmul.f32 %v300, %v823
        %827 = vrot.lane.b32.xlu0 %v825, 125
        %v828 = vpop.permute.xlu0 %827
        %v830 = vmul.f32 %v810, %v828
        %832 = vrot.lane.b32.xlu0 %v830, 4
        %v833 = vpop.permute.xlu0 %832
        %v835 = vsub.f32 %v300, %v833
        %836 = vset.pattern.permute.xlu0 3
        %837 = vperm.xlu0 %836, %v825
        %v838 = vpop.permute.xlu0 %837
        %v840 = vmul.f32 %v728, %v838
        %v841 = vmul.f32 %v730, %v838
        %843 = vset.pattern.permute.xlu0 4
        %844 = vperm.xlu0 %843, %v835
        %v845 = vpop.permute.xlu0 %844
        %v847 = vadd.f32 %v840, %v845
        %v848 = vadd.f32 %v841, %v845
        %v849 = vxor.u32 %v847, 2147483648
        %v850 = vxor.u32 %v848, 2147483648
        %v851 = vmul.f32 %v849, 1.442695
        %v852 = vpow.pop %v851
        %v853 = vmul.f32 %v850, 1.442695
        %v854 = vpow.pop %v853
        %v855 = vadd.f32 %v852, 1.0
        %v856 = vadd.f32 %v854, 1.0
        %v857 = vrcp.pop %v855
        %v858 = vmul.f32 1.0, %v857
        %v859 = vrcp.pop %v856
        %v860 = vmul.f32 1.0, %v859
        %v861 = vmul.f32 %v847, %v858
        %v862 = vmul.f32 %v848, %v860
        %863 = vrot.lane.b32.xlu0 %v861, 17
        %v864 = vpop.permute.xlu0 %863
        %865 = vrot.lane.b32.xlu0 %v862, 17
        %v866 = vpop.permute.xlu0 %865
        %v867 = vsel %vm439, %v864, %v866
        %v868 = vsel %vm439, %v866, %v864
        %v869 = vmul.f32 %v868, %v447
        %v870 = vmul.f32 %v867, %v451
        %v871 = vpack.c.bf16 %v869, %v869
        %v872 = vpack.c.bf16 %v870, %v870
        %873 = vrot.lane.b32.xlu0 %v861, 16
        %v874 = vpop.permute.xlu0 %873
        %875 = vrot.lane.b32.xlu0 %v862, 16
        %v876 = vpop.permute.xlu0 %875
        %v877 = vsel %vm462, %v874, %v876
        %v878 = vsel %vm462, %v876, %v874
        %v879 = vmul.f32 %v878, %v471
        %v880 = vmul.f32 %v877, %v475
        %v881 = vpack.c.bf16 %v879, %v879
        %v882 = vpack.c.bf16 %v880, %v880
        %883 = vrot.lane.b32.xlu0 %v861, 15
        %v884 = vpop.permute.xlu0 %883
        %885 = vrot.lane.b32.xlu0 %v862, 15
        %v886 = vpop.permute.xlu0 %885
        %v887 = vsel %vm486, %v884, %v886
        %v888 = vsel %vm486, %v886, %v884
        %v889 = vmul.f32 %v888, %v495
        %v890 = vmul.f32 %v887, %v499
        %v891 = vpack.c.bf16 %v889, %v889
        %v892 = vpack.c.bf16 %v890, %v890
        %893 = vrot.lane.b32.xlu0 %v861, 1
        %v894 = vpop.permute.xlu0 %893
        %895 = vrot.lane.b32.xlu0 %v862, 1
        %v896 = vpop.permute.xlu0 %895
        %v897 = vsel %vm510, %v894, %v896
        %v898 = vsel %vm510, %v896, %v894
        %v899 = vmul.f32 %v898, %v519
        %v900 = vmul.f32 %v897, %v523
        %v901 = vpack.c.bf16 %v899, %v899
        %v902 = vpack.c.bf16 %v900, %v900
        %v903 = vpack.c.bf16 %v861, %v861
        %v904 = vpack.c.bf16 %v862, %v862
        %905 = vrot.lane.b32.xlu0 %v861, 127
        %v906 = vpop.permute.xlu0 %905
        %907 = vrot.lane.b32.xlu0 %v862, 127
        %v908 = vpop.permute.xlu0 %907
        %v909 = vsel %vm536, %v906, %v908
        %v910 = vsel %vm536, %v908, %v906
        %v911 = vmul.f32 %v909, %v545
        %v912 = vmul.f32 %v910, %v549
        %v913 = vpack.c.bf16 %v911, %v911
        %v914 = vpack.c.bf16 %v912, %v912
        %915 = vrot.lane.b32.xlu0 %v861, 113
        %v916 = vpop.permute.xlu0 %915
        %917 = vrot.lane.b32.xlu0 %v862, 113
        %v918 = vpop.permute.xlu0 %917
        %v919 = vsel %vm560, %v916, %v918
        %v920 = vsel %vm560, %v918, %v916
        %v921 = vmul.f32 %v919, %v569
        %v922 = vmul.f32 %v920, %v573
        %v923 = vpack.c.bf16 %v921, %v921
        %v924 = vpack.c.bf16 %v922, %v922
        %925 = vrot.lane.b32.xlu0 %v861, 112
        %v926 = vpop.permute.xlu0 %925
        %927 = vrot.lane.b32.xlu0 %v862, 112
        %v928 = vpop.permute.xlu0 %927
        %v929 = vsel %vm584, %v926, %v928
        %v930 = vsel %vm584, %v928, %v926
        %v931 = vmul.f32 %v929, %v593
        %v932 = vmul.f32 %v930, %v597
        %v933 = vpack.c.bf16 %v931, %v931
        %v934 = vpack.c.bf16 %v932, %v932
        %935 = vrot.lane.b32.xlu0 %v861, 111
        %v936 = vpop.permute.xlu0 %935
        %937 = vrot.lane.b32.xlu0 %v862, 111
        %v938 = vpop.permute.xlu0 %937
        %v939 = vsel %vm608, %v936, %v938
        %v940 = vsel %vm608, %v938, %v936
        %v941 = vmul.f32 %v939, %v617
        %v942 = vmul.f32 %v940, %v621
        %v943 = vpack.c.bf16 %v941, %v941
        %v944 = vpack.c.bf16 %v942, %v942
        %v947 = vrot.slane %v881, 4
        %v948 = vrot.slane %v882, 4
        %v951 = vrot.slane %v901, 4
        %v952 = vrot.slane %v902, 4
        %v955 = vrot.slane %v913, 4
        %v956 = vrot.slane %v914, 4
        %v959 = vrot.slane %v933, 4
        %v960 = vrot.slane %v934, 4
        %v963 = vrot.slane %v298, 4
        %v964 = vrot.slane %v299, 4
        %v967 = vsel %vm644, %v871, %v947
        %v971 = vsel %vm644, %v872, %v948
        %v975 = vsel %vm644, %v891, %v951
        %v979 = vsel %vm644, %v892, %v952
        %v983 = vsel %vm644, %v903, %v955
        %v987 = vsel %vm644, %v904, %v956
        %v991 = vsel %vm644, %v923, %v959
        %v995 = vsel %vm644, %v924, %v960
        %v999 = vsel %vm644, %v943, %v963
        %v1003 = vsel %vm644, %v944, %v964
        %v1005 = vld [vmem:[%s5] sm:$0xf]
        %1006 = vset.pattern.permute.xlu0 5
        %1007 = vperm.xlu0 %1006, %v300
        %v1008 = vpop.permute.xlu0 %1007
        %vm1010 = vcmask 654336
        %v1012 = vsel %vm1010, %v1005, 0
        %1014 = vmatprep.subr.bf16.mxu0 %v971
        %1015 = vmatpush1.bf16.msra.mxu0 %v967
        %1016 = vmatprep.subr.bf16.mxu0 %v979
        %1017 = vmatpush1.bf16.msra.mxu0 %v975
        %1018 = vmatprep.subr.bf16.mxu0 %v987
        %1019 = vmatpush1.bf16.msra.mxu0 %v983
        %1020 = vmatprep.subr.bf16.mxu0 %v995
        %1021 = vmatpush1.bf16.msra.mxu0 %v991
        %1022 = vmatprep.subr.bf16.mxu0 %v1003
        %1023 = vmatpush1.bf16.msra.mxu0 %v999
        %1024 = vmatprep.subr.bf16.mxu0 0
        %1025 = vmatpush1.bf16.msra.mxu0 0
        %1026 = vmatprep.subr.bf16.mxu0 0
        %1027 = vmatpush1.bf16.msra.mxu0 0
        %1028 = vmatprep.subr.bf16.mxu0 0
        %1029 = vmatpush1.bf16.msra.mxu0 0
        %1030 = vmatprep.subr.bf16.mxu0 0
        %1031 = vmatpush1.bf16.msra.mxu0 0
        %1032 = vmatprep.subr.bf16.mxu0 0
        %1033 = vmatpush1.bf16.msra.mxu0 0
        %1034 = vmatprep.subr.bf16.mxu0 0
        %1035 = vmatpush1.bf16.msra.mxu0 0
        %1036 = vmatprep.subr.bf16.mxu0 0
        %1037 = vmatpush1.bf16.msra.mxu0 0
        %1038 = vmatprep.subr.bf16.mxu0 0
        %1039 = vmatpush1.bf16.msra.mxu0 0
        %1040 = vmatprep.subr.bf16.mxu0 0
        %1041 = vmatpush1.bf16.msra.mxu0 0
        %1042 = vmatprep.subr.bf16.mxu0 0
        %1043 = vmatpush1.bf16.msra.mxu0 0
        %1044 = vmatprep.subr.bf16.mxu0 0
        %1045 = vmatpush1.bf16.msra.mxu0 0
        %1046 = vmatprep.mubr.bf16.mxu0 0
        %1047 = vmatmul.mubr.bf16.gmra.mrb[0].mxu0 %v1012
        %v1048 = vpop.f32.mrb[0].mxu0
        %v1049 = vadd.f32 %v1008, %v1048
        %v1050 = vpop.f32.mrb[0].mxu0
        %v1051 = vadd.f32 %v1008, %v1050
        %v1052 = vpop.f32.mrb[0].mxu0
        %v1053 = vpop.f32.mrb[0].mxu0
        %1054 = vdwg.mxu0
        %1055 = vst [vmem:[%s294] sm:$0xff] %v1049
        %1056 = vst [vmem:[%s294 + $0x8] sm:$0xff] %v1051
        %s1057 = sand.u32 %s163, 1
        %s1058 = scalar_lea.sflag [#allocation4], %s1057
        %s1059 = sand.u32 %s163, 1
        %s1060 = smul.addr %s1059, 16
        %s1061 = scalar_lea.vmem [#allocation8], %s1060
        // Predicated region
        $region57: #{tpu_custom_call.1} parent=43 // pred_check
          %p1062 = pneg %p173
        $region58: #{tpu_custom_call.1} parent=43 // pred_check_branch
          %1064 = sbr.rel (%p1062) target = $region60
        $region59: #{tpu_custom_call.1} parent=43 // pred_region
          %s1066 = ssub.s32 256, 256
          %1067 = vsyncadd %s1058, %s1066
          %s1068 = smul.addr %s24, 2
          %s1069 = smul.addr %s1068, 128
          %s1070 = scalar_lea.hbm %s6, %s1069
          %s1072 = sshll.u32 %s1061, 4
          %s1073 = int_to_ptr.vmem [resolvable:$true] %s1072
          %1075 = dma.vmem_to_hbm [thread:$0]  %s1073, 256, %s1070, %s1058
        $region60: #{tpu_custom_call.1} parent=43 // pred_fallthru
          _
      $region44: #{tpu_custom_call.1} parent=5 // pred_fallthru
        _
      %p1076 = scmp.le.s32.totalorder 2, %s19
      // Predicated region
      $region61: #{tpu_custom_call.1} parent=5 // pred_check
        %p1077 = pneg %p1076
      $region62: #{tpu_custom_call.1} parent=5 // pred_check_branch
        %1079 = sbr.rel (%p1077) target = $region64
      $region63: #{tpu_custom_call.1} parent=5 // pred_region
        %s1080 = ssub.s32 %s19, 2
        // Predicated region
        $region65: #{tpu_custom_call.1} parent=63 // pred_check
          %p1081 = pneg %p179
        $region66: #{tpu_custom_call.1} parent=63 // pred_check_branch
          %1083 = sbr.rel (%p1081) target = $region68
        $region67: #{tpu_custom_call.1} parent=63 // pred_region
          %s1084 = sand.u32 %s164, 1
          %s1085 = scalar_lea.sflag [#allocation4], %s1084
          %s1086 = sand.u32 %s164, 1
          %s1087 = smul.addr %s1086, 16
          %s1088 = scalar_lea.vmem [#allocation8], %s1087
          %1089 = dma.done %s1085, 256
        $region68: #{tpu_custom_call.1} parent=63 // pred_fallthru
          _
      $region64: #{tpu_custom_call.1} parent=5 // pred_fallthru
        _
    $region6: #{tpu_custom_call.1} parent=1 // loop_footer
      %s23 = sadd.s32 1, %s19
    $region7: #{tpu_custom_call.1} parent=1 // loop_footer_branch
      %18 = sbr.rel target = $region3
    $region8: #{tpu_custom_call.1} parent=1 // loop_exit
      _
    %1090 = vsyncpa [#allocation3], 1
    %s1091 = scalar_lea.sflag [#allocation3], 1
    %1092 = vsyncpa %s1091, 1
    %1093 = vsyncpa [#allocation6], 1
    %1094 = vsyncpa [#allocation4], 1
    %s1095 = scalar_lea.sflag [#allocation4], 1
    %1096 = vsyncpa %s1095, 1

</llo_original>
